<compile_context>
chip_gen: v7x
topology: tpu7x:2x2x1
jax: 0.10.0
libtpu: 0.0.40
codegen_flags: <defaults>
</compile_context>

<pallas_src>
import functools
import math

import jax
import jax.numpy as jnp
from jax import lax
from jax.experimental import pallas as pl
from jax.experimental.pallas import tpu as pltpu

_LANES = 128
_CHUNK_ROWS = 128        # in-kernel streaming chunk: 128 x 128 f32 = 16 vregs
_MAX_TILE_ROWS = 4096    # 4096 x 128 x 4 B = 2 MiB per f32 input per buffer


def _round_up(x, m):
    return ((x + m - 1) // m) * m


def _cdiv(a, b):
    return -(-a // b)


def _sq_sum_kernel(pred_ref, tgt_ref, out_ref, *, tile_rows, chunk_rows, valid_rows):
    """Per-tile partial sum of (pred - tgt)^2 into an (8, 128) f32 block."""
    pid = pl.program_id(0)
    n_chunks = tile_rows // chunk_rows
    # Hoisted: same per-chunk row iota every iteration (only the limit changes).
    row_iota = lax.broadcasted_iota(jnp.int32, (chunk_rows, _LANES), 0)
    tile_base = pid * tile_rows

    def body(c, acc):
        r0 = pl.multiple_of(c * chunk_rows, chunk_rows)
        p = pred_ref[pl.ds(r0, chunk_rows), :].astype(jnp.float32)
        t = tgt_ref[pl.ds(r0, chunk_rows), :].astype(jnp.float32)
        d = p - t
        # Rows past `valid_rows` come from the clipped boundary DMA (garbage,
        # possibly NaN/Inf) -> select-zero them (where, not multiply).
        limit = valid_rows - tile_base - r0
        sq = jnp.where(row_iota < limit, d * d, 0.0)
        return acc + jnp.sum(sq.reshape(chunk_rows // 8, 8, _LANES), axis=0)

    acc = lax.fori_loop(0, n_chunks, body, jnp.zeros((8, _LANES), jnp.float32),
                        unroll=min(2, n_chunks))
    out_ref[...] = acc


def _masked_sq_sum_kernel(pred_ref, tgt_ref, mask_ref, out_ref, *,
                          tile_rows, chunk_rows, valid_rows):
    """Per-tile partials packed in one block: rows 0-7 = masked sq-diff sum,
    rows 8-15 = valid-element count."""
    pid = pl.program_id(0)
    n_chunks = tile_rows // chunk_rows
    row_iota = lax.broadcasted_iota(jnp.int32, (chunk_rows, _LANES), 0)
    tile_base = pid * tile_rows

    def body(c, carry):
        acc_s, acc_c = carry
        r0 = pl.multiple_of(c * chunk_rows, chunk_rows)
        p = pred_ref[pl.ds(r0, chunk_rows), :].astype(jnp.float32)
        t = tgt_ref[pl.ds(r0, chunk_rows), :].astype(jnp.float32)
        m = mask_ref[pl.ds(r0, chunk_rows), :].astype(jnp.float32)
        limit = valid_rows - tile_base - r0
        # `> 0.5` matches the PyTorch module for float/int masks; bool masks are
        # passed as int8 {0,1}, for which the same test is exact.
        valid = jnp.logical_and(m > 0.5, row_iota < limit)
        d = p - t
        sq = jnp.where(valid, d * d, 0.0)
        cnt = jnp.where(valid, 1.0, 0.0)
        acc_s = acc_s + jnp.sum(sq.reshape(chunk_rows // 8, 8, _LANES), axis=0)
        acc_c = acc_c + jnp.sum(cnt.reshape(chunk_rows // 8, 8, _LANES), axis=0)
        return acc_s, acc_c

    zero = jnp.zeros((8, _LANES), jnp.float32)
    acc_s, acc_c = lax.fori_loop(0, n_chunks, body, (zero, zero),
                                 unroll=min(2, n_chunks))
    out_ref[pl.ds(0, 8), :] = acc_s
    out_ref[pl.ds(8, 8), :] = acc_c


def _to_lane_slab(x, pad_to):
    """Flatten to a (rows, 128) lane-dense view; pad only if pad_to is given."""
    flat = x.reshape(-1)
    if pad_to is not None and pad_to > flat.shape[0]:
        flat = jnp.pad(flat, (0, pad_to - flat.shape[0]))
    return flat.reshape(-1, _LANES)


def rmse_loss(pred, target, mask=None, eps=1e-8):
    """Pallas TPU implementation of RMSELoss.forward."""
    if eps <= 0:
        raise ValueError("eps must be a positive float")
    if pred.shape != target.shape:
        raise ValueError(f"Shape mismatch: pred {pred.shape}, target {target.shape}")
    if not (jnp.issubdtype(pred.dtype, jnp.floating)
            and jnp.issubdtype(target.dtype, jnp.floating)):
        raise TypeError("Inputs must be floating-point tensors")
    if mask is not None and mask.shape != pred.shape:
        raise ValueError(f"Mask shape must match input shape: mask {mask.shape}")

    n = int(math.prod(pred.shape))
    if n == 0:
        # No valid pixels at all.
        return jnp.asarray(0.0, dtype=pred.dtype)

    rows0 = _cdiv(n, _LANES)
    # Zero-copy (bitcast) reshape when n is lane-aligned; pad only for a ragged
    # lane tail or a tiny non-8-aligned row count.  Padded zeros never affect
    # the sum or count.
    needs_pad = (n % _LANES != 0) or (rows0 < 2 * _CHUNK_ROWS and rows0 % 8 != 0)
    pad_to = _round_up(n, 8 * _LANES) if needs_pad else None

    pred2d = _to_lane_slab(pred, pad_to)
    tgt2d = _to_lane_slab(target, pad_to)
    rows = pred2d.shape[0]

    if rows >= 2 * _CHUNK_ROWS:
        th = min(_MAX_TILE_ROWS,
                 _round_up(_cdiv(rows, 2), _CHUNK_ROWS),   # >= 2 grid steps (v7x 2 TCs)
                 (rows // _CHUNK_ROWS) * _CHUNK_ROWS)      # tile never exceeds the array
        chunk = _CHUNK_ROWS
    else:
        th = rows                                          # block == full array rows
        chunk = rows
    num_tiles = _cdiv(rows, th)

    compiler_params = pltpu.CompilerParams(
        dimension_semantics=("parallel",),      # independent per-tile partials
        vmem_limit_bytes=32 * 1024 * 1024,      # safe on v5e/v6e/v7x
    )
    in_spec = pl.BlockSpec((th, _LANES), lambda i: (i, 0))
    in_bytes = (pred2d.size * pred2d.dtype.itemsize
                + tgt2d.size * tgt2d.dtype.itemsize)

    if mask is None:
        kernel = functools.partial(_sq_sum_kernel, tile_rows=th,
                                   chunk_rows=chunk, valid_rows=rows)
        out_rows = num_tiles * 8
        cost = pl.CostEstimate(flops=3 * n, transcendentals=0,
                               bytes_accessed=in_bytes + out_rows * _LANES * 4)
        partial = pl.pallas_call(
            kernel,
            out_shape=jax.ShapeDtypeStruct((out_rows, _LANES), jnp.float32),
            grid_spec=pltpu.PrefetchScalarGridSpec(
                num_scalar_prefetch=0,
                grid=(num_tiles,),
                in_specs=[in_spec, in_spec],
                out_specs=pl.BlockSpec((8, _LANES), lambda i: (i, 0)),
            ),
            compiler_params=compiler_params,
            cost_estimate=cost,
        )(pred2d, tgt2d)

        mean_sq = jnp.sum(partial) / jnp.float32(n)
        return jnp.sqrt(mean_sq + jnp.float32(eps)).astype(pred.dtype)

    # Masked path: bool masks travel as int8 (1 B/elem); other dtypes keep
    # their native width; the `> 0.5` threshold is applied inside the kernel.
    mask_arr = mask.astype(jnp.int8) if mask.dtype == jnp.bool_ else mask
    mask2d = _to_lane_slab(mask_arr, pad_to)   # pad zeros -> never counted

    kernel = functools.partial(_masked_sq_sum_kernel, tile_rows=th,
                               chunk_rows=chunk, valid_rows=rows)
    out_rows = num_tiles * 16
    cost = pl.CostEstimate(
        flops=6 * n, transcendentals=0,
        bytes_accessed=(in_bytes + mask2d.size * mask2d.dtype.itemsize
                        + out_rows * _LANES * 4))
    packed = pl.pallas_call(
        kernel,
        out_shape=jax.ShapeDtypeStruct((out_rows, _LANES), jnp.float32),
        grid_spec=pltpu.PrefetchScalarGridSpec(
            num_scalar_prefetch=0,
            grid=(num_tiles,),
            in_specs=[in_spec, in_spec, in_spec],
            out_specs=pl.BlockSpec((16, _LANES), lambda i: (i, 0)),
        ),
        compiler_params=compiler_params,
        cost_estimate=cost,
    )(pred2d, tgt2d, mask2d)

    packed = packed.reshape(num_tiles, 16, _LANES)
    sum_sq = jnp.sum(packed[:, :8, :])
    count = jnp.sum(packed[:, 8:, :])
    mean_sq = sum_sq / jnp.maximum(count, 1.0)
    rmse = jnp.sqrt(mean_sq + jnp.float32(eps))
    rmse = jnp.where(count > 0, rmse, jnp.float32(0.0))  # empty-mask fallback -> 0.0
    return rmse.astype(pred.dtype)


def _reference_rmse(pred, target, mask=None, eps=1e-8):
    sq = (pred.astype(jnp.float32) - target.astype(jnp.float32)) ** 2
    if mask is None:
        return jnp.sqrt(jnp.mean(sq) + eps).astype(pred.dtype)
    m = mask if mask.dtype == jnp.bool_ else (mask > 0.5)
    cnt = jnp.sum(m)
    s = jnp.sum(jnp.where(m, sq, 0.0))
    mean = s / jnp.maximum(cnt, 1)
    out = jnp.where(cnt > 0, jnp.sqrt(mean + eps), 0.0)
    return out.astype(pred.dtype)


if __name__ == "__main__":
    key = jax.random.PRNGKey(0)
    k1, k2, k3, k4, k5 = jax.random.split(key, 5)
    eps = 1e-8

    # Small image-loss shape: (B, C, H, W) = (2, 4, 16, 16).  n % 128 == 0,
    # so the zero-copy single-tile path is taken.
    B, C, H, W = 2, 4, 16, 16
    pred = jax.random.uniform(k1, (B, C, H, W), dtype=jnp.float32)
    target = jax.random.uniform(k2, (B, C, H, W), dtype=jnp.float32)
    fmask = jax.random.uniform(k3, (B, C, H, W), dtype=jnp.float32)  # float mask -> >0.5 rule

    loss = jax.block_until_ready(rmse_loss(pred, target, eps=eps))
    ref = _reference_rmse(pred, target, eps=eps)
    assert jnp.allclose(loss, ref, rtol=1e-5, atol=1e-6), (loss, ref)

    loss_m = jax.block_until_ready(rmse_loss(pred, target, mask=fmask, eps=eps))
    ref_m = _reference_rmse(pred, target, mask=fmask, eps=eps)
    assert jnp.allclose(loss_m, ref_m, rtol=1e-5, atol=1e-6), (loss_m, ref_m)

    # Mid-size shape exercising the multi-tile path with a clipped boundary
    # tile (600 rows, 384-row tile) and the int8 bool-mask path.
    pred2 = jax.random.uniform(k4, (2, 3, 100, 128), dtype=jnp.float32)
    target2 = jax.random.uniform(k5, (2, 3, 100, 128), dtype=jnp.float32)
    bmask2 = jax.random.uniform(k3, (2, 3, 100, 128)) > 0.3

    loss2 = jax.block_until_ready(rmse_loss(pred2, target2, eps=eps))
    ref2 = _reference_rmse(pred2, target2, eps=eps)
    assert jnp.allclose(loss2, ref2, rtol=1e-5, atol=1e-6), (loss2, ref2)

    loss2_m = jax.block_until_ready(rmse_loss(pred2, target2, mask=bmask2, eps=eps))
    ref2_m = _reference_rmse(pred2, target2, mask=bmask2, eps=eps)
    assert jnp.allclose(loss2_m, ref2_m, rtol=1e-5, atol=1e-6), (loss2_m, ref2_m)

    # bf16 inputs stay bf16 in HBM; accumulation is f32 in-kernel.
    loss_bf = jax.block_until_ready(
        rmse_loss(pred2.astype(jnp.bfloat16), target2.astype(jnp.bfloat16), eps=eps))
    ref_bf = _reference_rmse(pred2.astype(jnp.bfloat16),
                             target2.astype(jnp.bfloat16), eps=eps)
    assert jnp.allclose(loss_bf.astype(jnp.float32), ref_bf.astype(jnp.float32),
                        rtol=2e-2, atol=2e-2), (loss_bf, ref_bf)

    # Ragged lane tail (n % 128 != 0) takes the small zero-pad fallback path.
    pred3 = jax.random.uniform(k1, (3, 5, 37, 7), dtype=jnp.float32)
    target3 = jax.random.uniform(k2, (3, 5, 37, 7), dtype=jnp.float32)
    loss3 = jax.block_until_ready(rmse_loss(pred3, target3, eps=eps))
    ref3 = _reference_rmse(pred3, target3, eps=eps)
    assert jnp.allclose(loss3, ref3, rtol=1e-5, atol=1e-6), (loss3, ref3)

    print("KERNEL_OK")
</pallas_src>

<mosaic_0001>
module attributes {stable_mosaic.version = 11 : i64} {
  func.func @_sq_sum_kernel(%arg0: i32, %arg1: memref<16x128xf32, #tpu.memory_space<vmem>>, %arg2: memref<16x128xf32, #tpu.memory_space<vmem>>, %arg3: memref<8x128xf32, #tpu.memory_space<vmem>>) attributes {dimension_semantics = [#tpu.dimension_semantics<parallel>], iteration_bounds = array<i64: 1>, scalar_prefetch = 0 : i64, scratch_operands = 0 : i64, tpu.core_type = #tpu.core_type<tc>, window_params = [{transform_indices = @transform_0, window_bounds = array<i64: 16, 128>}, {transform_indices = @transform_1, window_bounds = array<i64: 16, 128>}, {transform_indices = @transform_2, window_bounds = array<i64: 8, 128>}]} {
    %0 = tpu.iota {dimensions = array<i32: 0>} : vector<16x128xi32>
    %c16_i32 = arith.constant 16 : i32
    %1 = arith.muli %arg0, %c16_i32 : i32
    %cst = arith.constant 0.000000e+00 : f32
    %2 = vector.broadcast %cst : f32 to vector<8x128xf32>
    %c0_i32 = arith.constant 0 : i32
    %c16_i32_0 = arith.constant 16 : i32
    %3 = arith.muli %c0_i32, %c16_i32_0 : i32
    %4 = tpu.assume_multiple %3, 16 : i32
    %5 = arith.index_cast %4 : i32 to index
    %c0 = arith.constant 0 : index
    %6 = vector.load %arg1[%5, %c0] : memref<16x128xf32, #tpu.memory_space<vmem>>, vector<16x128xf32>
    %7 = arith.index_cast %4 : i32 to index
    %c0_1 = arith.constant 0 : index
    %8 = vector.load %arg2[%7, %c0_1] : memref<16x128xf32, #tpu.memory_space<vmem>>, vector<16x128xf32>
    %9 = arith.subf %6, %8 : vector<16x128xf32>
    %c16_i32_2 = arith.constant 16 : i32
    %10 = arith.subi %c16_i32_2, %1 : i32
    %11 = arith.subi %10, %4 : i32
    %12 = vector.broadcast %11 : i32 to vector<16x128xi32>
    %13 = arith.cmpi slt, %0, %12 : vector<16x128xi32>
    %14 = arith.mulf %9, %9 : vector<16x128xf32>
    %cst_3 = arith.constant 0.000000e+00 : f32
    %15 = vector.broadcast %cst_3 : f32 to vector<16x128xf32>
    %16 = arith.select %13, %14, %15 : vector<16x128xi1>, vector<16x128xf32>
    %17 = vector.shape_cast %16 : vector<16x128xf32> to vector<2x8x128xf32>
    %cst_4 = arith.constant dense<0.000000e+00> : vector<8x128xf32>
    %18 = vector.multi_reduction <add>, %17, %cst_4 [0] : vector<2x8x128xf32> to vector<8x128xf32>
    %19 = arith.addf %2, %18 : vector<8x128xf32>
    %c1_i32 = arith.constant 1 : i32
    %c0_5 = arith.constant 0 : index
    %c0_6 = arith.constant 0 : index
    %20 = vector.load %arg3[%c0_5, %c0_6] : memref<8x128xf32, #tpu.memory_space<vmem>>, vector<8x128xf32>
    tpu.vector_store %arg3[%c0_5, %c0_6], %19 {strides = array<i32>} : memref<8x128xf32, #tpu.memory_space<vmem>>, vector<8x128xf32>,
    return
  }
  func.func @transform_0(%arg0: i32) -> (i32, i32) {
    %c0_i32 = arith.constant 0 : i32
    %c0_i32_0 = arith.constant 0 : i32
    return %arg0, %c0_i32 : i32, i32
  }
  func.func @transform_1(%arg0: i32) -> (i32, i32) {
    %c0_i32 = arith.constant 0 : i32
    %c0_i32_0 = arith.constant 0 : i32
    return %arg0, %c0_i32 : i32, i32
  }
  func.func @transform_2(%arg0: i32) -> (i32, i32) {
    %c0_i32 = arith.constant 0 : i32
    %c0_i32_0 = arith.constant 0 : i32
    return %arg0, %c0_i32 : i32, i32
  }
}

</mosaic_0001>

<llo_original>
// kernel: tpu_custom_call.1
$region0: #{tpu_custom_call.1}
  #allocation0 [shape = 'u32[]', space=smem, size = 0x4, offset = 0x4, fixed_abs, tag = 'smem constant byte address 0x4 - core index']
  #allocation1 [shape = 'u32[144,128]{1,0:T(1,128)}', space=vmem, size = 0x12000, scoped, tag = 'internal scratch']
  %s0 = inlined_call_operand.hbm [shape: f32[16,128], index: 0, kind: input, shape index: {}]
  %s1 = inlined_call_operand.hbm [shape: f32[16,128], index: 1, kind: input, shape index: {}]
  %s2 = inlined_call_operand.hbm [shape: f32[8,128], index: 2, kind: output, shape index: {}]
  %s3 = sld [smem:[#allocation0]]
  $region26: #{tpu_custom_call.1} parent=0
    _
  %s5 = ssub.s32 1, %s3
  %s6 = scalar_select 0, %s5, %s3
  $region1: #{tpu_custom_call.1} parent=0
    #allocation2 [shape = 'u8[8192]{0}', space=vmem, size = 0x2000, scoped, tag = 'input window, operand 0, single buffered']
    #allocation3 [shape = 's32[1]{0}', space=sflag, size = 0x4, scoped, tag = 'scoped memory for tpu_custom_call.1']
    #allocation4 [shape = 's32[1]{0}', space=sflag, size = 0x4, scoped, tag = 'scoped memory for tpu_custom_call.1']
    #allocation5 [shape = 'u8[8192]{0}', space=vmem, size = 0x2000, scoped, tag = 'input window, operand 1, single buffered']
    #allocation6 [shape = 's32[1]{0}', space=sflag, size = 0x4, scoped, tag = 'scoped memory for tpu_custom_call.1']
    #allocation7 [shape = 'u8[4096]{0}', space=vmem, size = 0x1000, scoped, tag = 'output window, operand 0, single buffered']
    %7 = vsyncpa [#allocation3], 0
    %8 = vsyncpa [#allocation6], 0
    %9 = vsyncpa [#allocation4], 0
    // Predicated region
    $region2: #{tpu_custom_call.1} parent=1 // pred_check
      _
    $region3: #{tpu_custom_call.1} parent=1 // pred_check_branch
      %11 = sbr.rel (0) target = $region5
    $region4: #{tpu_custom_call.1} parent=1 // pred_region
      %s13 = ssub.s32 256, 256
      %14 = vsyncadd [#allocation3], %s13
      %s15 = sshll.u32 [#allocation2], 4
      %s16 = int_to_ptr.vmem [resolvable:$true] %s15
      %21 = dma.hbm_to_vmem [thread:$0]  %s0, 256, %s16, [#allocation3], 128, 128, 8
    $region5: #{tpu_custom_call.1} parent=1 // pred_fallthru
      _
    // Predicated region
    $region6: #{tpu_custom_call.1} parent=1 // pred_check
      _
    $region7: #{tpu_custom_call.1} parent=1 // pred_check_branch
      %23 = sbr.rel (0) target = $region9
    $region8: #{tpu_custom_call.1} parent=1 // pred_region
      %s25 = ssub.s32 256, 256
      %26 = vsyncadd [#allocation6], %s25
      %s27 = sshll.u32 [#allocation5], 4
      %s28 = int_to_ptr.vmem [resolvable:$true] %s27
      %33 = dma.hbm_to_vmem [thread:$0]  %s1, 256, %s28, [#allocation6], 128, 128, 8
    $region9: #{tpu_custom_call.1} parent=1 // pred_fallthru
      _
    // Predicated region
    $region10: #{tpu_custom_call.1} parent=1 // pred_check
      _
    $region11: #{tpu_custom_call.1} parent=1 // pred_check_branch
      %35 = sbr.rel (0) target = $region13
    $region12: #{tpu_custom_call.1} parent=1 // pred_region
      %36 = dma.done [#allocation3], 256
    $region13: #{tpu_custom_call.1} parent=1 // pred_fallthru
      _
    // Predicated region
    $region14: #{tpu_custom_call.1} parent=1 // pred_check
      _
    $region15: #{tpu_custom_call.1} parent=1 // pred_check_branch
      %38 = sbr.rel (0) target = $region17
    $region16: #{tpu_custom_call.1} parent=1 // pred_region
      %39 = dma.done [#allocation6], 256
    $region17: #{tpu_custom_call.1} parent=1 // pred_fallthru
      _
    %v40 = vlaneseq
    %v41 = vshrl.u32 %v40, 7
    %v42 = vadd.s32 %v41, 8
    %s43 = smul.u32 0, 16
    %v44 = vld [vmem:[#allocation2] sm:$0xff]
    %v45 = vld [vmem:[#allocation2 + $0x8] sm:$0xff]
    %v46 = vld [vmem:[#allocation5] sm:$0xff]
    %v47 = vld [vmem:[#allocation5 + $0x8] sm:$0xff]
    %v48 = vsub.f32 %v44, %v46
    %v49 = vsub.f32 %v45, %v47
    %s50 = ssub.s32 16, %s43
    %s51 = ssub.s32 %s50, 0
    %v52 = vstv %s51
    %vm53 = vcmp.lt.s32.totalorder %v41, %v52
    %vm54 = vcmp.lt.s32.totalorder %v42, %v52
    %v55 = vmul.f32 %v48, %v48
    %v56 = vmul.f32 %v49, %v49
    %v57 = vsel %vm53, %v55, 0.0
    %v58 = vsel %vm54, %v56, 0.0
    %v59 = vadd.f32 %v57, %v58
    %v60 = vadd.f32 %v59, 0.0
    %61 = vst [vmem:[#allocation7] sm:$0xff] %v60
    // Predicated region
    $region18: #{tpu_custom_call.1} parent=1 // pred_check
      _
    $region19: #{tpu_custom_call.1} parent=1 // pred_check_branch
      %63 = sbr.rel (0) target = $region21
    $region20: #{tpu_custom_call.1} parent=1 // pred_region
      %s65 = ssub.s32 128, 128
      %66 = vsyncadd [#allocation4], %s65
      %s68 = sshll.u32 [#allocation7], 4
      %s69 = int_to_ptr.vmem [resolvable:$true] %s68
      %71 = dma.vmem_to_hbm [thread:$0]  %s69, 128, %s2, [#allocation4]
    $region21: #{tpu_custom_call.1} parent=1 // pred_fallthru
      _
    // Predicated region
    $region22: #{tpu_custom_call.1} parent=1 // pred_check
      _
    $region23: #{tpu_custom_call.1} parent=1 // pred_check_branch
      %73 = sbr.rel (0) target = $region25
    $region24: #{tpu_custom_call.1} parent=1 // pred_region
      %74 = dma.done [#allocation4], 128
    $region25: #{tpu_custom_call.1} parent=1 // pred_fallthru
      _
    %75 = vsyncpa [#allocation3], 1
    %76 = vsyncpa [#allocation6], 1
    %77 = vsyncpa [#allocation4], 1

</llo_original>
